<compile_context>
chip_gen: v7x
topology: tpu7x:2x2x1
jax: 0.10.0
libtpu: 0.0.40
codegen_flags: <defaults>
</compile_context>

<pallas_src>
import functools

import jax
import jax.numpy as jnp
from jax.experimental import pallas as pl
from jax.experimental.pallas import tpu as pltpu


def _round_up(v, m):
    return ((v + m - 1) // m) * m


def _cdiv(a, b):
    return (a + b - 1) // b


# ---------------------------------------------------------------------------
# Kernel: one batch tile per grid step; weights/biases stay resident in VMEM.
# The (tile_b, S) f32 input tile is zero-padded to (tile_b, S_pad) bf16 in a
# VMEM scratch buffer *inside* the kernel (no wrapper-side pad/cast of x).
# ---------------------------------------------------------------------------
def qnet_kernel(x_ref, w1_ref, b1_ref, w2_ref, b2_ref, w3_ref, b3_ref,
                o_ref, xpad_ref, *, state_dim):
    # Zero-fill the padded input buffer (cheap VPU fill), then drop the real
    # features into the first `state_dim` lanes (small masked store).
    xpad_ref[...] = jnp.zeros_like(xpad_ref)
    xpad_ref[:, :state_dim] = x_ref[...].astype(jnp.bfloat16)
    x = xpad_ref[...]                                                   # (TB, Sp) bf16

    h1 = jnp.dot(x, w1_ref[...], preferred_element_type=jnp.float32)   # (TB, Hp) f32
    h1 = jnp.maximum(h1 + b1_ref[...], 0.0).astype(jnp.bfloat16)
    h2 = jnp.dot(h1, w2_ref[...], preferred_element_type=jnp.float32)
    h2 = jnp.maximum(h2 + b2_ref[...], 0.0).astype(jnp.bfloat16)
    out = jnp.dot(h2, w3_ref[...], preferred_element_type=jnp.float32)
    o_ref[...] = (out + b3_ref[...]).astype(o_ref.dtype)               # lane-dense bf16 store


# ---------------------------------------------------------------------------
# One-time parameter preparation: (out, in) PyTorch weights -> bf16 (in, out),
# zero-padded to multiples of 128 on both feature axes. Biases stay f32.
# ---------------------------------------------------------------------------
def prepare_params(params, state_dim, hidden_dim, action_dim):
    S_pad = _round_up(state_dim, 128)
    H_pad = _round_up(hidden_dim, 128)
    A_pad = _round_up(action_dim, 128)

    def pad_w(w, in_pad, out_pad):
        wt = jnp.asarray(w, jnp.float32).T.astype(jnp.bfloat16)         # (in, out)
        return jnp.pad(wt, ((0, in_pad - wt.shape[0]), (0, out_pad - wt.shape[1])))

    def pad_b(b, out_pad):
        b2d = jnp.asarray(b, jnp.float32)[None, :]
        return jnp.pad(b2d, ((0, 0), (0, out_pad - b2d.shape[1])))

    return {
        "w1": pad_w(params["fc1_w"], S_pad, H_pad), "b1": pad_b(params["fc1_b"], H_pad),
        "w2": pad_w(params["fc2_w"], H_pad, H_pad), "b2": pad_b(params["fc2_b"], H_pad),
        "w3": pad_w(params["fc3_w"], H_pad, A_pad), "b3": pad_b(params["fc3_b"], A_pad),
        "dims": (state_dim, hidden_dim, action_dim, S_pad, H_pad, A_pad),
    }


# ---------------------------------------------------------------------------
# Batch tiling: 16-row aligned (bf16); >= 2 grid steps when B_pad > 256 so the
# "parallel" grid axis can be sharded across v7x's two TensorCores; large tiles
# are 256-row aligned for long DMAs.
# ---------------------------------------------------------------------------
def _choose_batch_tiling(batch, tile_b_max):
    b16 = _round_up(batch, 16)
    if b16 <= 256:
        tile_b = b16
    else:
        tile_b = min(_round_up(tile_b_max, 256), _round_up(_cdiv(b16, 2), 256))
    b_pad = _round_up(b16, tile_b)
    return b_pad, tile_b


# ---------------------------------------------------------------------------
# Forward: rows-only batch pad in the wrapper, lane pad/cast in the kernel,
# bf16 output sliced/upcast in the wrapper.
# ---------------------------------------------------------------------------
def qnet_forward(x, prep, tile_b_max=1024):
    S, H, A, S_pad, H_pad, A_pad = prep["dims"]
    B = x.shape[0]
    B_pad, tile_b = _choose_batch_tiling(B, tile_b_max)
    n_tiles = B_pad // tile_b

    x = x.astype(jnp.float32)
    if B_pad != B:
        x = jnp.pad(x, ((0, B_pad - B), (0, 0)))   # rows only; lane pad is in-kernel

    w1, b1 = prep["w1"], prep["b1"]
    w2, b2 = prep["w2"], prep["b2"]
    w3, b3 = prep["w3"], prep["b3"]

    # True (unpadded) FLOPs + actual bytes moved, as a scheduling hint only.
    flops = 2 * B * (S * H + H * H + H * A)
    bytes_accessed = (B_pad * S * 4
                      + (w1.size + w2.size + w3.size) * 2
                      + (b1.size + b2.size + b3.size) * 4
                      + B_pad * A_pad * 2)

    # VMEM budget: double-buffered x/out tiles, resident weights/biases,
    # xpad scratch, f32 intermediates.
    need = (2 * tile_b * S * 4
            + 2 * tile_b * A_pad * 2
            + 2 * (w1.size + w2.size + w3.size) * 2
            + 2 * (b1.size + b2.size + b3.size) * 4
            + tile_b * S_pad * 2
            + 3 * tile_b * H_pad * 4)
    vmem_limit = int(min(32 << 20, max(2 * need, 4 << 20)))  # safe on v5e/v6e/v7x

    const = lambda arr: pl.BlockSpec(arr.shape, lambda i: (0,) * arr.ndim)

    out_padded = pl.pallas_call(
        functools.partial(qnet_kernel, state_dim=S),
        out_shape=jax.ShapeDtypeStruct((B_pad, A_pad), jnp.bfloat16),
        grid=(n_tiles,),
        in_specs=[
            pl.BlockSpec((tile_b, S), lambda i: (i, 0)),   # x tile (pipelined, raw lanes)
            const(w1), const(b1),                           # weights/biases resident
            const(w2), const(b2),
            const(w3), const(b3),
        ],
        out_specs=pl.BlockSpec((tile_b, A_pad), lambda i: (i, 0)),
        scratch_shapes=[pltpu.VMEM((tile_b, S_pad), jnp.bfloat16)],
        compiler_params=pltpu.CompilerParams(
            dimension_semantics=("parallel",),
            vmem_limit_bytes=vmem_limit,
        ),
        cost_estimate=pl.CostEstimate(
            flops=flops, transcendentals=0, bytes_accessed=bytes_accessed),
    )(x, w1, b1, w2, b2, w3, b3)

    return out_padded[:B, :A].astype(jnp.float32)


# ---------------------------------------------------------------------------
# Init + references
# ---------------------------------------------------------------------------
def init_params(key, state_dim, hidden_dim, action_dim):
    ks = jax.random.split(key, 6)

    def lin(kw, kb, fan_in, fan_out):
        bound = 1.0 / jnp.sqrt(jnp.float32(fan_in))
        w = jax.random.uniform(kw, (fan_out, fan_in), jnp.float32, -bound, bound)
        b = jax.random.uniform(kb, (fan_out,), jnp.float32, -bound, bound)
        return w, b

    w1, b1 = lin(ks[0], ks[1], state_dim, hidden_dim)
    w2, b2 = lin(ks[2], ks[3], hidden_dim, hidden_dim)
    w3, b3 = lin(ks[4], ks[5], hidden_dim, action_dim)
    return {"fc1_w": w1, "fc1_b": b1,
            "fc2_w": w2, "fc2_b": b2,
            "fc3_w": w3, "fc3_b": b3}


def qnet_reference_f32(x, p):
    h = jnp.maximum(x @ p["fc1_w"].T + p["fc1_b"], 0.0)
    h = jnp.maximum(h @ p["fc2_w"].T + p["fc2_b"], 0.0)
    return h @ p["fc3_w"].T + p["fc3_b"]


def qnet_reference_bf16(x, p):
    # Mirrors the kernel numerics exactly: bf16 operands, f32 MXU accumulation
    # (preferred_element_type), f32 bias add, bf16 intermediate/output rounding.
    bf, f32 = jnp.bfloat16, jnp.float32
    h = jnp.dot(x.astype(bf), p["fc1_w"].T.astype(bf), preferred_element_type=f32)
    h = jnp.maximum(h + p["fc1_b"], 0.0).astype(bf)
    h = jnp.dot(h, p["fc2_w"].T.astype(bf), preferred_element_type=f32)
    h = jnp.maximum(h + p["fc2_b"], 0.0).astype(bf)
    h = jnp.dot(h, p["fc3_w"].T.astype(bf), preferred_element_type=f32)
    return (h + p["fc3_b"]).astype(bf).astype(f32)


if __name__ == "__main__":
    state_dim, hidden_dim, action_dim = 4, 32, 2

    key = jax.random.PRNGKey(0)
    kp, kx1, kx2 = jax.random.split(key, 3)
    params = init_params(kp, state_dim, hidden_dim, action_dim)
    prep = prepare_params(params, state_dim, hidden_dim, action_dim)  # one-time cost

    # Small per-step batch (single grid step).
    x_small = jax.random.normal(kx1, (8, state_dim), jnp.float32)
    out_small = jax.block_until_ready(qnet_forward(x_small, prep))
    assert out_small.shape == (8, action_dim)
    assert jnp.allclose(out_small, qnet_reference_bf16(x_small, params),
                        atol=2e-2, rtol=2e-2), "mismatch vs bf16 reference (small)"
    assert jnp.allclose(out_small, qnet_reference_f32(x_small, params),
                        atol=5e-2, rtol=5e-2), "mismatch vs f32 reference (small)"

    # Larger batch: exercises row padding and a multi-step (>=2 tiles) grid.
    x_big = jax.random.normal(kx2, (384, state_dim), jnp.float32)
    out_big = jax.block_until_ready(qnet_forward(x_big, prep))
    assert out_big.shape == (384, action_dim)
    assert jnp.allclose(out_big, qnet_reference_bf16(x_big, params),
                        atol=2e-2, rtol=2e-2), "mismatch vs bf16 reference (big)"
    assert jnp.allclose(out_big, qnet_reference_f32(x_big, params),
                        atol=5e-2, rtol=5e-2), "mismatch vs f32 reference (big)"

    print("KERNEL_OK")
</pallas_src>

<mosaic_0001>
module attributes {stable_mosaic.version = 11 : i64} {
  func.func @qnet_kernel(%arg0: i32, %arg1: memref<16x4xf32, #tpu.memory_space<vmem>>, %arg2: memref<128x128xbf16, #tpu.memory_space<vmem>>, %arg3: memref<1x128xf32, #tpu.memory_space<vmem>>, %arg4: memref<128x128xbf16, #tpu.memory_space<vmem>>, %arg5: memref<1x128xf32, #tpu.memory_space<vmem>>, %arg6: memref<128x128xbf16, #tpu.memory_space<vmem>>, %arg7: memref<1x128xf32, #tpu.memory_space<vmem>>, %arg8: memref<16x128xbf16, #tpu.memory_space<vmem>>, %arg9: memref<16x128xbf16, #tpu.memory_space<vmem>>) attributes {dimension_semantics = [#tpu.dimension_semantics<parallel>], iteration_bounds = array<i64: 1>, scalar_prefetch = 0 : i64, scratch_operands = 1 : i64, tpu.core_type = #tpu.core_type<tc>, window_params = [{transform_indices = @transform_0, window_bounds = array<i64: 16, 4>}, {pipeline_mode = #tpu.pipeline_mode<synchronous>, transform_indices = @transform_1, window_bounds = array<i64: 128, 128>}, {pipeline_mode = #tpu.pipeline_mode<synchronous>, transform_indices = @transform_2, window_bounds = array<i64: 1, 128>}, {pipeline_mode = #tpu.pipeline_mode<synchronous>, transform_indices = @transform_3, window_bounds = array<i64: 128, 128>}, {pipeline_mode = #tpu.pipeline_mode<synchronous>, transform_indices = @transform_4, window_bounds = array<i64: 1, 128>}, {pipeline_mode = #tpu.pipeline_mode<synchronous>, transform_indices = @transform_5, window_bounds = array<i64: 128, 128>}, {pipeline_mode = #tpu.pipeline_mode<synchronous>, transform_indices = @transform_6, window_bounds = array<i64: 1, 128>}, {transform_indices = @transform_7, window_bounds = array<i64: 16, 128>}]} {
    %cst = arith.constant 0.000000e+00 : bf16
    %0 = vector.broadcast %cst : bf16 to vector<16x128xbf16>
    %c0 = arith.constant 0 : index
    %c0_0 = arith.constant 0 : index
    %1 = vector.load %arg9[%c0, %c0_0] : memref<16x128xbf16, #tpu.memory_space<vmem>>, vector<16x128xbf16>
    tpu.vector_store %arg9[%c0, %c0_0], %0 {strides = array<i32>} : memref<16x128xbf16, #tpu.memory_space<vmem>>, vector<16x128xbf16>,
    %c0_1 = arith.constant 0 : index
    %c0_2 = arith.constant 0 : index
    %2 = vector.load %arg1[%c0_1, %c0_2] : memref<16x4xf32, #tpu.memory_space<vmem>>, vector<16x4xf32>
    %3 = arith.truncf %2 : vector<16x4xf32> to vector<16x4xbf16>
    %c0_3 = arith.constant 0 : index
    %c0_4 = arith.constant 0 : index
    %4 = vector.load %arg9[%c0_3, %c0_4] : memref<16x128xbf16, #tpu.memory_space<vmem>>, vector<16x4xbf16>
    tpu.vector_store %arg9[%c0_3, %c0_4], %3 {strides = array<i32>} : memref<16x128xbf16, #tpu.memory_space<vmem>>, vector<16x4xbf16>,
    %c0_5 = arith.constant 0 : index
    %c0_6 = arith.constant 0 : index
    %5 = vector.load %arg9[%c0_5, %c0_6] : memref<16x128xbf16, #tpu.memory_space<vmem>>, vector<16x128xbf16>
    %c0_7 = arith.constant 0 : index
    %c0_8 = arith.constant 0 : index
    %6 = vector.load %arg2[%c0_7, %c0_8] : memref<128x128xbf16, #tpu.memory_space<vmem>>, vector<128x128xbf16>
    %cst_9 = arith.constant dense<0.000000e+00> : vector<16x128xf32>
    %7 = tpu.matmul %5, %6, %cst_9 {dimension_numbers = #tpu.dot_dimension_numbers<[1], [0], [0], [1], [0, 0, 1, 1], [], []>} : vector<16x128xbf16>, vector<128x128xbf16>, vector<16x128xf32> -> vector<16x128xf32>
    %c0_10 = arith.constant 0 : index
    %c0_11 = arith.constant 0 : index
    %8 = vector.load %arg3[%c0_10, %c0_11] : memref<1x128xf32, #tpu.memory_space<vmem>>, vector<1x128xf32>
    %9 = vector.broadcast %8 : vector<1x128xf32> to vector<16x128xf32>
    %10 = arith.addf %7, %9 : vector<16x128xf32>
    %cst_12 = arith.constant 0.000000e+00 : f32
    %11 = vector.broadcast %cst_12 : f32 to vector<16x128xf32>
    %12 = arith.maximumf %10, %11 : vector<16x128xf32>
    %13 = arith.truncf %12 : vector<16x128xf32> to vector<16x128xbf16>
    %c0_13 = arith.constant 0 : index
    %c0_14 = arith.constant 0 : index
    %14 = vector.load %arg4[%c0_13, %c0_14] : memref<128x128xbf16, #tpu.memory_space<vmem>>, vector<128x128xbf16>
    %cst_15 = arith.constant dense<0.000000e+00> : vector<16x128xf32>
    %15 = tpu.matmul %13, %14, %cst_15 {dimension_numbers = #tpu.dot_dimension_numbers<[1], [0], [0], [1], [0, 0, 1, 1], [], []>} : vector<16x128xbf16>, vector<128x128xbf16>, vector<16x128xf32> -> vector<16x128xf32>
    %c0_16 = arith.constant 0 : index
    %c0_17 = arith.constant 0 : index
    %16 = vector.load %arg5[%c0_16, %c0_17] : memref<1x128xf32, #tpu.memory_space<vmem>>, vector<1x128xf32>
    %17 = vector.broadcast %16 : vector<1x128xf32> to vector<16x128xf32>
    %18 = arith.addf %15, %17 : vector<16x128xf32>
    %cst_18 = arith.constant 0.000000e+00 : f32
    %19 = vector.broadcast %cst_18 : f32 to vector<16x128xf32>
    %20 = arith.maximumf %18, %19 : vector<16x128xf32>
    %21 = arith.truncf %20 : vector<16x128xf32> to vector<16x128xbf16>
    %c0_19 = arith.constant 0 : index
    %c0_20 = arith.constant 0 : index
    %22 = vector.load %arg6[%c0_19, %c0_20] : memref<128x128xbf16, #tpu.memory_space<vmem>>, vector<128x128xbf16>
    %cst_21 = arith.constant dense<0.000000e+00> : vector<16x128xf32>
    %23 = tpu.matmul %21, %22, %cst_21 {dimension_numbers = #tpu.dot_dimension_numbers<[1], [0], [0], [1], [0, 0, 1, 1], [], []>} : vector<16x128xbf16>, vector<128x128xbf16>, vector<16x128xf32> -> vector<16x128xf32>
    %c0_22 = arith.constant 0 : index
    %c0_23 = arith.constant 0 : index
    %24 = vector.load %arg7[%c0_22, %c0_23] : memref<1x128xf32, #tpu.memory_space<vmem>>, vector<1x128xf32>
    %25 = vector.broadcast %24 : vector<1x128xf32> to vector<16x128xf32>
    %26 = arith.addf %23, %25 : vector<16x128xf32>
    %27 = arith.truncf %26 : vector<16x128xf32> to vector<16x128xbf16>
    %c0_24 = arith.constant 0 : index
    %c0_25 = arith.constant 0 : index
    %28 = vector.load %arg8[%c0_24, %c0_25] : memref<16x128xbf16, #tpu.memory_space<vmem>>, vector<16x128xbf16>
    tpu.vector_store %arg8[%c0_24, %c0_25], %27 {strides = array<i32>} : memref<16x128xbf16, #tpu.memory_space<vmem>>, vector<16x128xbf16>,
    return
  }
  func.func @transform_0(%arg0: i32) -> (i32, i32) {
    %c0_i32 = arith.constant 0 : i32
    %c0_i32_0 = arith.constant 0 : i32
    return %arg0, %c0_i32 : i32, i32
  }
  func.func @transform_1(%arg0: i32) -> (i32, i32) {
    %c0_i32 = arith.constant 0 : i32
    %c0_i32_0 = arith.constant 0 : i32
    %c0_i32_1 = arith.constant 0 : i32
    return %c0_i32, %c0_i32_0 : i32, i32
  }
  func.func @transform_2(%arg0: i32) -> (i32, i32) {
    %c0_i32 = arith.constant 0 : i32
    %c0_i32_0 = arith.constant 0 : i32
    %c0_i32_1 = arith.constant 0 : i32
    return %c0_i32, %c0_i32_0 : i32, i32
  }
  func.func @transform_3(%arg0: i32) -> (i32, i32) {
    %c0_i32 = arith.constant 0 : i32
    %c0_i32_0 = arith.constant 0 : i32
    %c0_i32_1 = arith.constant 0 : i32
    return %c0_i32, %c0_i32_0 : i32, i32
  }
  func.func @transform_4(%arg0: i32) -> (i32, i32) {
    %c0_i32 = arith.constant 0 : i32
    %c0_i32_0 = arith.constant 0 : i32
    %c0_i32_1 = arith.constant 0 : i32
    return %c0_i32, %c0_i32_0 : i32, i32
  }
  func.func @transform_5(%arg0: i32) -> (i32, i32) {
    %c0_i32 = arith.constant 0 : i32
    %c0_i32_0 = arith.constant 0 : i32
    %c0_i32_1 = arith.constant 0 : i32
    return %c0_i32, %c0_i32_0 : i32, i32
  }
  func.func @transform_6(%arg0: i32) -> (i32, i32) {
    %c0_i32 = arith.constant 0 : i32
    %c0_i32_0 = arith.constant 0 : i32
    %c0_i32_1 = arith.constant 0 : i32
    return %c0_i32, %c0_i32_0 : i32, i32
  }
  func.func @transform_7(%arg0: i32) -> (i32, i32) {
    %c0_i32 = arith.constant 0 : i32
    %c0_i32_0 = arith.constant 0 : i32
    return %arg0, %c0_i32 : i32, i32
  }
}

</mosaic_0001>

<llo_original>
// kernel: tpu_custom_call.1
$region0: #{tpu_custom_call.1}
  #allocation0 [shape = 'u32[]', space=smem, size = 0x4, offset = 0x4, fixed_abs, tag = 'smem constant byte address 0x4 - core index']
  #allocation1 [shape = 'u32[144,128]{1,0:T(1,128)}', space=vmem, size = 0x12000, scoped, tag = 'internal scratch']
  #allocation2 [shape = 'bf16[16,128]{1,0:T(16,128)(2,1)}', space=vmem, size = 0x1000, scoped, tag = 'scratch operand']
  %s0 = inlined_call_operand.vmem [shape: f32[16,4], index: 0, kind: input, shape index: {}]
  %s1 = inlined_call_operand.hbm [shape: bf16[128,128], index: 1, kind: input, shape index: {}]
  %s2 = inlined_call_operand.vmem [shape: f32[1,128], index: 2, kind: input, shape index: {}]
  %s3 = inlined_call_operand.hbm [shape: bf16[128,128], index: 3, kind: input, shape index: {}]
  %s4 = inlined_call_operand.vmem [shape: f32[1,128], index: 4, kind: input, shape index: {}]
  %s5 = inlined_call_operand.hbm [shape: bf16[128,128], index: 5, kind: input, shape index: {}]
  %s6 = inlined_call_operand.vmem [shape: f32[1,128], index: 6, kind: input, shape index: {}]
  %s7 = inlined_call_operand.hbm [shape: bf16[16,128], index: 7, kind: output, shape index: {}]
  %s8 = sld [smem:[#allocation0]]
  $region50: #{tpu_custom_call.1} parent=0
    _
  %s10 = ssub.s32 1, %s8
  %s11 = scalar_select 0, %s10, %s8
  $region1: #{tpu_custom_call.1} parent=0
    #allocation3 [shape = 'u8[32768]{0}', space=vmem, size = 0x8000, scoped, tag = 'input window, operand 1, single buffered']
    #allocation4 [shape = 's32[1]{0}', space=sflag, size = 0x4, scoped, tag = 'scoped memory for tpu_custom_call.1']
    #allocation5 [shape = 's32[1]{0}', space=sflag, size = 0x4, scoped, tag = 'scoped memory for tpu_custom_call.1']
    #allocation6 [shape = 'u8[32768]{0}', space=vmem, size = 0x8000, scoped, tag = 'input window, operand 3, single buffered']
    #allocation7 [shape = 's32[1]{0}', space=sflag, size = 0x4, scoped, tag = 'scoped memory for tpu_custom_call.1']
    #allocation8 [shape = 'u8[32768]{0}', space=vmem, size = 0x8000, scoped, tag = 'input window, operand 5, single buffered']
    #allocation9 [shape = 'u8[4096]{0}', space=vmem, size = 0x1000, scoped, tag = 'output window, operand 0, single buffered']
    %12 = vsyncpa [#allocation4], 0
    %13 = vsyncpa [#allocation7], 0
    %14 = vsyncpa [#allocation5], 0
    // Predicated region
    $region2: #{tpu_custom_call.1} parent=1 // pred_check
      _
    $region3: #{tpu_custom_call.1} parent=1 // pred_check_branch
      %16 = sbr.rel (0) target = $region5
    $region4: #{tpu_custom_call.1} parent=1 // pred_region
      _
    $region5: #{tpu_custom_call.1} parent=1 // pred_fallthru
      _
    // Predicated region
    $region6: #{tpu_custom_call.1} parent=1 // pred_check
      _
    $region7: #{tpu_custom_call.1} parent=1 // pred_check_branch
      %18 = sbr.rel (0) target = $region9
    $region8: #{tpu_custom_call.1} parent=1 // pred_region
      %s20 = ssub.s32 1024, 1024
      %21 = vsyncadd [#allocation4], %s20
      %s22 = sshll.u32 [#allocation3], 4
      %s23 = int_to_ptr.vmem [resolvable:$true] %s22
      %28 = dma.hbm_to_vmem [thread:$0]  %s1, 1024, %s23, [#allocation4], 64, 64, 4
    $region9: #{tpu_custom_call.1} parent=1 // pred_fallthru
      _
    // Predicated region
    $region10: #{tpu_custom_call.1} parent=1 // pred_check
      _
    $region11: #{tpu_custom_call.1} parent=1 // pred_check_branch
      %30 = sbr.rel (0) target = $region13
    $region12: #{tpu_custom_call.1} parent=1 // pred_region
      _
    $region13: #{tpu_custom_call.1} parent=1 // pred_fallthru
      _
    // Predicated region
    $region14: #{tpu_custom_call.1} parent=1 // pred_check
      _
    $region15: #{tpu_custom_call.1} parent=1 // pred_check_branch
      %32 = sbr.rel (0) target = $region17
    $region16: #{tpu_custom_call.1} parent=1 // pred_region
      %s34 = ssub.s32 1024, 1024
      %35 = vsyncadd [#allocation7], %s34
      %s36 = sshll.u32 [#allocation6], 4
      %s37 = int_to_ptr.vmem [resolvable:$true] %s36
      %42 = dma.hbm_to_vmem [thread:$0]  %s3, 1024, %s37, [#allocation7], 64, 64, 4
    $region17: #{tpu_custom_call.1} parent=1 // pred_fallthru
      _
    // Predicated region
    $region18: #{tpu_custom_call.1} parent=1 // pred_check
      _
    $region19: #{tpu_custom_call.1} parent=1 // pred_check_branch
      %44 = sbr.rel (0) target = $region21
    $region20: #{tpu_custom_call.1} parent=1 // pred_region
      _
    $region21: #{tpu_custom_call.1} parent=1 // pred_fallthru
      _
    // Predicated region
    $region22: #{tpu_custom_call.1} parent=1 // pred_check
      _
    $region23: #{tpu_custom_call.1} parent=1 // pred_check_branch
      %46 = sbr.rel (0) target = $region25
    $region24: #{tpu_custom_call.1} parent=1 // pred_region
      %s48 = ssub.s32 1024, 1024
      %49 = vsyncadd [#allocation7], %s48
      %s50 = sshll.u32 [#allocation8], 4
      %s51 = int_to_ptr.vmem [resolvable:$true] %s50
      %56 = dma.hbm_to_vmem [thread:$0]  %s5, 1024, %s51, [#allocation7], 64, 64, 4
    $region25: #{tpu_custom_call.1} parent=1 // pred_fallthru
      _
    // Predicated region
    $region26: #{tpu_custom_call.1} parent=1 // pred_check
      _
    $region27: #{tpu_custom_call.1} parent=1 // pred_check_branch
      %58 = sbr.rel (0) target = $region29
    $region28: #{tpu_custom_call.1} parent=1 // pred_region
      _
    $region29: #{tpu_custom_call.1} parent=1 // pred_fallthru
      _
    // Predicated region
    $region30: #{tpu_custom_call.1} parent=1 // pred_check
      _
    $region31: #{tpu_custom_call.1} parent=1 // pred_check_branch
      %60 = sbr.rel (0) target = $region33
    $region32: #{tpu_custom_call.1} parent=1 // pred_region
      %61 = dma.done [#allocation4], 1024
    $region33: #{tpu_custom_call.1} parent=1 // pred_fallthru
      _
    // Predicated region
    $region34: #{tpu_custom_call.1} parent=1 // pred_check
      _
    $region35: #{tpu_custom_call.1} parent=1 // pred_check_branch
      %63 = sbr.rel (0) target = $region37
    $region36: #{tpu_custom_call.1} parent=1 // pred_region
      %64 = dma.done [#allocation7], 1024
    $region37: #{tpu_custom_call.1} parent=1 // pred_fallthru
      _
    // Predicated region
    $region38: #{tpu_custom_call.1} parent=1 // pred_check
      _
    $region39: #{tpu_custom_call.1} parent=1 // pred_check_branch
      %66 = sbr.rel (0) target = $region41
    $region40: #{tpu_custom_call.1} parent=1 // pred_region
      %67 = dma.done [#allocation7], 1024
    $region41: #{tpu_custom_call.1} parent=1 // pred_fallthru
      _
    %69 = vst [vmem:[#allocation2] sm:$0xff] 0
    %v70 = vld [vmem:[%s0] sm:$0xff]
    %v71 = vld [vmem:[%s0 + $0x8] sm:$0xff]
    %v72 = vpack.c.bf16 %v71, %v70
    %vm73 = vcmask 31744
    %74 = vst.msk [vmem:[#allocation2] sm:$0xff] %vm73, %v72
    %v75 = vld [vmem:[#allocation2] sm:$0xff]
    %v76 = vld [vmem:[#allocation3] sm:$0xf]
    %v77 = vld [vmem:[#allocation3 + $0x4] sm:$0xf]
    %v78 = vld [vmem:[#allocation3 + $0x8] sm:$0xf]
    %v79 = vld [vmem:[#allocation3 + $0xc] sm:$0xf]
    %v80 = vld [vmem:[#allocation3 + $0x10] sm:$0xf]
    %v81 = vld [vmem:[#allocation3 + $0x14] sm:$0xf]
    %v82 = vld [vmem:[#allocation3 + $0x18] sm:$0xf]
    %v83 = vld [vmem:[#allocation3 + $0x1c] sm:$0xf]
    %v84 = vld [vmem:[#allocation3 + $0x20] sm:$0xf]
    %v85 = vld [vmem:[#allocation3 + $0x24] sm:$0xf]
    %v86 = vld [vmem:[#allocation3 + $0x28] sm:$0xf]
    %v87 = vld [vmem:[#allocation3 + $0x2c] sm:$0xf]
    %v88 = vld [vmem:[#allocation3 + $0x30] sm:$0xf]
    %v89 = vld [vmem:[#allocation3 + $0x34] sm:$0xf]
    %v90 = vld [vmem:[#allocation3 + $0x38] sm:$0xf]
    %v91 = vld [vmem:[#allocation3 + $0x3c] sm:$0xf]
    %v92 = vld [vmem:[%s2] sm:$0x1]
    %v94 = vlaneseq
    %v95 = vshrl.u32 %v94, 7
    %v96 = vsub.s32 0, %v95
    %v97 = vrot.slane %v92, %v96
    %v115 = vunpack.c.l.b16 %v76
    %v116 = vunpack.c.l.b16 %v77
    %v117 = vunpack.c.l.b16 %v78
    %v118 = vunpack.c.l.b16 %v79
    %v119 = vunpack.c.l.b16 %v80
    %v120 = vunpack.c.l.b16 %v81
    %v121 = vunpack.c.l.b16 %v82
    %v122 = vunpack.c.l.b16 %v83
    %v123 = vunpack.c.l.b16 %v84
    %v124 = vunpack.c.l.b16 %v85
    %v125 = vunpack.c.l.b16 %v86
    %v126 = vunpack.c.l.b16 %v87
    %v127 = vunpack.c.l.b16 %v88
    %v128 = vunpack.c.l.b16 %v89
    %v129 = vunpack.c.l.b16 %v90
    %v130 = vunpack.c.l.b16 %v91
    %v131 = vpack.c.b16 %v116, %v115
    %v132 = vpack.c.b16 %v118, %v117
    %v133 = vpack.c.b16 %v120, %v119
    %v134 = vpack.c.b16 %v122, %v121
    %v135 = vpack.c.b16 %v124, %v123
    %v136 = vpack.c.b16 %v126, %v125
    %v137 = vpack.c.b16 %v128, %v127
    %v138 = vpack.c.b16 %v130, %v129
    %147 = vmatprep.subr.bf16.mxu0 0
    %148 = vmatpush1.bf16.msra.mxu0 %v131
    %149 = vmatprep.subr.bf16.mxu0 0
    %150 = vmatpush1.bf16.msra.mxu0 %v132
    %151 = vmatprep.subr.bf16.mxu0 0
    %152 = vmatpush1.bf16.msra.mxu0 %v133
    %153 = vmatprep.subr.bf16.mxu0 0
    %154 = vmatpush1.bf16.msra.mxu0 %v134
    %155 = vmatprep.subr.bf16.mxu0 0
    %156 = vmatpush1.bf16.msra.mxu0 %v135
    %157 = vmatprep.subr.bf16.mxu0 0
    %158 = vmatpush1.bf16.msra.mxu0 %v136
    %159 = vmatprep.subr.bf16.mxu0 0
    %160 = vmatpush1.bf16.msra.mxu0 %v137
    %161 = vmatprep.subr.bf16.mxu0 0
    %162 = vmatpush1.bf16.msra.mxu0 %v138
    %163 = vmatprep.subr.bf16.mxu0 0
    %164 = vmatpush1.bf16.msra.mxu0 0
    %165 = vmatprep.subr.bf16.mxu0 0
    %166 = vmatpush1.bf16.msra.mxu0 0
    %167 = vmatprep.subr.bf16.mxu0 0
    %168 = vmatpush1.bf16.msra.mxu0 0
    %169 = vmatprep.subr.bf16.mxu0 0
    %170 = vmatpush1.bf16.msra.mxu0 0
    %171 = vmatprep.subr.bf16.mxu0 0
    %172 = vmatpush1.bf16.msra.mxu0 0
    %173 = vmatprep.subr.bf16.mxu0 0
    %174 = vmatpush1.bf16.msra.mxu0 0
    %175 = vmatprep.subr.bf16.mxu0 0
    %176 = vmatpush1.bf16.msra.mxu0 0
    %177 = vmatprep.subr.bf16.mxu0 0
    %178 = vmatpush1.bf16.msra.mxu0 0
    %179 = vmatprep.mubr.bf16.mxu0 0
    %180 = vmatmul.mubr.bf16.gmra.mrb[0].mxu0 %v75
    %v181 = vpop.f32.mrb[0].mxu0
    %v182 = vadd.f32 %v97, %v181
    %v183 = vpop.f32.mrb[0].mxu0
    %v184 = vpop.f32.mrb[0].mxu0
    %v185 = vadd.f32 %v97, %v184
    %v186 = vpop.f32.mrb[0].mxu0
    %187 = vdwg.mxu0
    %v188 = vmax.f32 %v182, 0.0
    %v189 = vmax.f32 %v185, 0.0
    %v190 = vpack.c.bf16 %v189, %v188
    %v191 = vld [vmem:[#allocation6] sm:$0xf]
    %v192 = vld [vmem:[#allocation6 + $0x4] sm:$0xf]
    %v193 = vld [vmem:[#allocation6 + $0x8] sm:$0xf]
    %v194 = vld [vmem:[#allocation6 + $0xc] sm:$0xf]
    %v195 = vld [vmem:[#allocation6 + $0x10] sm:$0xf]
    %v196 = vld [vmem:[#allocation6 + $0x14] sm:$0xf]
    %v197 = vld [vmem:[#allocation6 + $0x18] sm:$0xf]
    %v198 = vld [vmem:[#allocation6 + $0x1c] sm:$0xf]
    %v199 = vld [vmem:[#allocation6 + $0x20] sm:$0xf]
    %v200 = vld [vmem:[#allocation6 + $0x24] sm:$0xf]
    %v201 = vld [vmem:[#allocation6 + $0x28] sm:$0xf]
    %v202 = vld [vmem:[#allocation6 + $0x2c] sm:$0xf]
    %v203 = vld [vmem:[#allocation6 + $0x30] sm:$0xf]
    %v204 = vld [vmem:[#allocation6 + $0x34] sm:$0xf]
    %v205 = vld [vmem:[#allocation6 + $0x38] sm:$0xf]
    %v206 = vld [vmem:[#allocation6 + $0x3c] sm:$0xf]
    %v207 = vld [vmem:[%s4] sm:$0x1]
    %v209 = vlaneseq
    %v210 = vshrl.u32 %v209, 7
    %v211 = vsub.s32 0, %v210
    %v212 = vrot.slane %v207, %v211
    %v230 = vunpack.c.l.b16 %v191
    %v231 = vunpack.c.l.b16 %v192
    %v232 = vunpack.c.l.b16 %v193
    %v233 = vunpack.c.l.b16 %v194
    %v234 = vunpack.c.l.b16 %v195
    %v235 = vunpack.c.l.b16 %v196
    %v236 = vunpack.c.l.b16 %v197
    %v237 = vunpack.c.l.b16 %v198
    %v238 = vunpack.c.l.b16 %v199
    %v239 = vunpack.c.l.b16 %v200
    %v240 = vunpack.c.l.b16 %v201
    %v241 = vunpack.c.l.b16 %v202
    %v242 = vunpack.c.l.b16 %v203
    %v243 = vunpack.c.l.b16 %v204
    %v244 = vunpack.c.l.b16 %v205
    %v245 = vunpack.c.l.b16 %v206
    %v246 = vpack.c.b16 %v231, %v230
    %v247 = vpack.c.b16 %v233, %v232
    %v248 = vpack.c.b16 %v235, %v234
    %v249 = vpack.c.b16 %v237, %v236
    %v250 = vpack.c.b16 %v239, %v238
    %v251 = vpack.c.b16 %v241, %v240
    %v252 = vpack.c.b16 %v243, %v242
    %v253 = vpack.c.b16 %v245, %v244
    %262 = vmatprep.subr.bf16.mxu0 0
    %263 = vmatpush1.bf16.msra.mxu0 %v246
    %264 = vmatprep.subr.bf16.mxu0 0
    %265 = vmatpush1.bf16.msra.mxu0 %v247
    %266 = vmatprep.subr.bf16.mxu0 0
    %267 = vmatpush1.bf16.msra.mxu0 %v248
    %268 = vmatprep.subr.bf16.mxu0 0
    %269 = vmatpush1.bf16.msra.mxu0 %v249
    %270 = vmatprep.subr.bf16.mxu0 0
    %271 = vmatpush1.bf16.msra.mxu0 %v250
    %272 = vmatprep.subr.bf16.mxu0 0
    %273 = vmatpush1.bf16.msra.mxu0 %v251
    %274 = vmatprep.subr.bf16.mxu0 0
    %275 = vmatpush1.bf16.msra.mxu0 %v252
    %276 = vmatprep.subr.bf16.mxu0 0
    %277 = vmatpush1.bf16.msra.mxu0 %v253
    %278 = vmatprep.subr.bf16.mxu0 0
    %279 = vmatpush1.bf16.msra.mxu0 0
    %280 = vmatprep.subr.bf16.mxu0 0
    %281 = vmatpush1.bf16.msra.mxu0 0
    %282 = vmatprep.subr.bf16.mxu0 0
    %283 = vmatpush1.bf16.msra.mxu0 0
    %284 = vmatprep.subr.bf16.mxu0 0
    %285 = vmatpush1.bf16.msra.mxu0 0
    %286 = vmatprep.subr.bf16.mxu0 0
    %287 = vmatpush1.bf16.msra.mxu0 0
    %288 = vmatprep.subr.bf16.mxu0 0
    %289 = vmatpush1.bf16.msra.mxu0 0
    %290 = vmatprep.subr.bf16.mxu0 0
    %291 = vmatpush1.bf16.msra.mxu0 0
    %292 = vmatprep.subr.bf16.mxu0 0
    %293 = vmatpush1.bf16.msra.mxu0 0
    %294 = vmatprep.mubr.bf16.mxu0 0
    %295 = vmatmul.mubr.bf16.gmra.mrb[0].mxu0 %v190
    %v296 = vpop.f32.mrb[0].mxu0
    %v297 = vadd.f32 %v212, %v296
    %v298 = vpop.f32.mrb[0].mxu0
    %v299 = vpop.f32.mrb[0].mxu0
    %v300 = vadd.f32 %v212, %v299
    %v301 = vpop.f32.mrb[0].mxu0
    %302 = vdwg.mxu0
    %v303 = vmax.f32 %v297, 0.0
    %v304 = vmax.f32 %v300, 0.0
    %v305 = vpack.c.bf16 %v304, %v303
    %v306 = vld [vmem:[#allocation8] sm:$0xf]
    %v307 = vld [vmem:[#allocation8 + $0x4] sm:$0xf]
    %v308 = vld [vmem:[#allocation8 + $0x8] sm:$0xf]
    %v309 = vld [vmem:[#allocation8 + $0xc] sm:$0xf]
    %v310 = vld [vmem:[#allocation8 + $0x10] sm:$0xf]
    %v311 = vld [vmem:[#allocation8 + $0x14] sm:$0xf]
    %v312 = vld [vmem:[#allocation8 + $0x18] sm:$0xf]
    %v313 = vld [vmem:[#allocation8 + $0x1c] sm:$0xf]
    %v314 = vld [vmem:[#allocation8 + $0x20] sm:$0xf]
    %v315 = vld [vmem:[#allocation8 + $0x24] sm:$0xf]
    %v316 = vld [vmem:[#allocation8 + $0x28] sm:$0xf]
    %v317 = vld [vmem:[#allocation8 + $0x2c] sm:$0xf]
    %v318 = vld [vmem:[#allocation8 + $0x30] sm:$0xf]
    %v319 = vld [vmem:[#allocation8 + $0x34] sm:$0xf]
    %v320 = vld [vmem:[#allocation8 + $0x38] sm:$0xf]
    %v321 = vld [vmem:[#allocation8 + $0x3c] sm:$0xf]
    %v322 = vld [vmem:[%s6] sm:$0x1]
    %v324 = vlaneseq
    %v325 = vshrl.u32 %v324, 7
    %v326 = vsub.s32 0, %v325
    %v327 = vrot.slane %v322, %v326
    %v345 = vunpack.c.l.b16 %v306
    %v346 = vunpack.c.l.b16 %v307
    %v347 = vunpack.c.l.b16 %v308
    %v348 = vunpack.c.l.b16 %v309
    %v349 = vunpack.c.l.b16 %v310
    %v350 = vunpack.c.l.b16 %v311
    %v351 = vunpack.c.l.b16 %v312
    %v352 = vunpack.c.l.b16 %v313
    %v353 = vunpack.c.l.b16 %v314
    %v354 = vunpack.c.l.b16 %v315
    %v355 = vunpack.c.l.b16 %v316
    %v356 = vunpack.c.l.b16 %v317
    %v357 = vunpack.c.l.b16 %v318
    %v358 = vunpack.c.l.b16 %v319
    %v359 = vunpack.c.l.b16 %v320
    %v360 = vunpack.c.l.b16 %v321
    %v361 = vpack.c.b16 %v346, %v345
    %v362 = vpack.c.b16 %v348, %v347
    %v363 = vpack.c.b16 %v350, %v349
    %v364 = vpack.c.b16 %v352, %v351
    %v365 = vpack.c.b16 %v354, %v353
    %v366 = vpack.c.b16 %v356, %v355
    %v367 = vpack.c.b16 %v358, %v357
    %v368 = vpack.c.b16 %v360, %v359
    %377 = vmatprep.subr.bf16.mxu0 0
    %378 = vmatpush1.bf16.msra.mxu0 %v361
    %379 = vmatprep.subr.bf16.mxu0 0
    %380 = vmatpush1.bf16.msra.mxu0 %v362
    %381 = vmatprep.subr.bf16.mxu0 0
    %382 = vmatpush1.bf16.msra.mxu0 %v363
    %383 = vmatprep.subr.bf16.mxu0 0
    %384 = vmatpush1.bf16.msra.mxu0 %v364
    %385 = vmatprep.subr.bf16.mxu0 0
    %386 = vmatpush1.bf16.msra.mxu0 %v365
    %387 = vmatprep.subr.bf16.mxu0 0
    %388 = vmatpush1.bf16.msra.mxu0 %v366
    %389 = vmatprep.subr.bf16.mxu0 0
    %390 = vmatpush1.bf16.msra.mxu0 %v367
    %391 = vmatprep.subr.bf16.mxu0 0
    %392 = vmatpush1.bf16.msra.mxu0 %v368
    %393 = vmatprep.subr.bf16.mxu0 0
    %394 = vmatpush1.bf16.msra.mxu0 0
    %395 = vmatprep.subr.bf16.mxu0 0
    %396 = vmatpush1.bf16.msra.mxu0 0
    %397 = vmatprep.subr.bf16.mxu0 0
    %398 = vmatpush1.bf16.msra.mxu0 0
    %399 = vmatprep.subr.bf16.mxu0 0
    %400 = vmatpush1.bf16.msra.mxu0 0
    %401 = vmatprep.subr.bf16.mxu0 0
    %402 = vmatpush1.bf16.msra.mxu0 0
    %403 = vmatprep.subr.bf16.mxu0 0
    %404 = vmatpush1.bf16.msra.mxu0 0
    %405 = vmatprep.subr.bf16.mxu0 0
    %406 = vmatpush1.bf16.msra.mxu0 0
    %407 = vmatprep.subr.bf16.mxu0 0
    %408 = vmatpush1.bf16.msra.mxu0 0
    %409 = vmatprep.mubr.bf16.mxu0 0
    %410 = vmatmul.mubr.bf16.gmra.mrb[0].mxu0 %v305
    %v411 = vpop.f32.mrb[0].mxu0
    %v412 = vadd.f32 %v327, %v411
    %v413 = vpop.f32.mrb[0].mxu0
    %v414 = vpop.f32.mrb[0].mxu0
    %v415 = vadd.f32 %v327, %v414
    %v416 = vpop.f32.mrb[0].mxu0
    %417 = vdwg.mxu0
    %v418 = vpack.c.bf16 %v415, %v412
    %v420 = vunpack.c.l.b16 %v418
    %v421 = vunpack.c.h.b16 %v418
    %v422 = vpack.c.b16 %v420, %v420
    %v423 = vpack.c.b16 %v421, %v421
    %426 = vst [vmem:[#allocation9] sm:$0xf] %v422
    %427 = vst [vmem:[#allocation9 + $0x4] sm:$0xf] %v423
    // Predicated region
    $region42: #{tpu_custom_call.1} parent=1 // pred_check
      _
    $region43: #{tpu_custom_call.1} parent=1 // pred_check_branch
      %429 = sbr.rel (0) target = $region45
    $region44: #{tpu_custom_call.1} parent=1 // pred_region
      %s431 = ssub.s32 128, 128
      %432 = vsyncadd [#allocation5], %s431
      %s433 = sshll.u32 [#allocation9], 4
      %s434 = int_to_ptr.vmem [resolvable:$true] %s433
      %439 = dma.vmem_to_hbm [thread:$0]  %s434, 128, %s7, [#allocation5], 64, 64, 4
    $region45: #{tpu_custom_call.1} parent=1 // pred_fallthru
      _
    // Predicated region
    $region46: #{tpu_custom_call.1} parent=1 // pred_check
      _
    $region47: #{tpu_custom_call.1} parent=1 // pred_check_branch
      %441 = sbr.rel (0) target = $region49
    $region48: #{tpu_custom_call.1} parent=1 // pred_region
      %442 = dma.done [#allocation5], 128
    $region49: #{tpu_custom_call.1} parent=1 // pred_fallthru
      _
    %443 = vsyncpa [#allocation4], 1
    %444 = vsyncpa [#allocation7], 1
    %445 = vsyncpa [#allocation5], 1

</llo_original>
